<compile_context>
chip_gen: v6e
topology: v6e:2x2x1
jax: 0.10.0
libtpu: 0.0.40
codegen_flags: <defaults>
</compile_context>

<pallas_src>
import functools

import jax
import jax.numpy as jnp
from jax.experimental import pallas as pl
from jax.experimental.pallas import tpu as pltpu


# ----------------------------- Pallas kernel -------------------------------

def mlp_kernel(x_ref,
               w1_ref, b1_ref,
               w2_ref, b2_ref,
               w3_ref, b3_ref,
               w4_ref, b4_ref,
               w5_ref, b5_ref,
               o_ref, *, act_dtype):
    x = x_ref[...]                       # (3, TB)  f32, batch on lanes
    w1 = w1_ref[...]                     # (20, 3)  f32

    # Layer 1 (K=3): three broadcast-FMAs on the VPU.
    h = jnp.tanh(w1[:, 0:1] * x[0:1, :]
                 + w1[:, 1:2] * x[1:2, :]
                 + w1[:, 2:3] * x[2:3, :]
                 + b1_ref[...])          # (20, TB) f32

    mxu_dt = w2_ref.dtype                # bf16 by default, f32 opt-in

    def dense(w_ref, b_ref, h_in, act):
        # MXU matmul with f32 accumulation; bias-add in f32; activation runs
        # in act_dtype (bf16 on v6e/v7x: halves EUP/VPU vreg traffic and feeds
        # the next bf16 matmul with no extra cast).
        z = jnp.dot(w_ref[...], h_in.astype(mxu_dt),
                    preferred_element_type=jnp.float32) + b_ref[...]
        return act(z.astype(act_dtype))

    h = dense(w2_ref, b2_ref, h, jnp.tanh)                        # (200, TB)
    h = dense(w3_ref, b3_ref, h, jnp.tanh)                        # (200, TB)
    h = dense(w4_ref, b4_ref, h, lambda v: jnp.maximum(v, 0.0))   # (100, TB)

    y = jnp.dot(w5_ref[...], h.astype(mxu_dt),
                preferred_element_type=jnp.float32) + b5_ref[...]  # (1, TB)
    o_ref[...] = y.astype(o_ref.dtype)


# ------------------------------ wrapper ------------------------------------

def _round_up(a, m):
    return (a + m - 1) // m * m


def _device_kind():
    try:
        return jax.devices()[0].device_kind.lower()
    except Exception:
        return ""


def _num_tensorcores():
    # v7x has 2 TensorCores per chip; the single "parallel" grid axis is
    # sharded across them.  v5e/v6e have one TC.
    k = _device_kind()
    return 2 if ("v7" in k or "7x" in k) else 1


def _default_dtypes():
    # bf16 MXU inputs everywhere (bf16-native MXU on all generations, f32
    # accumulation preserved).  bf16 activation/tanh path only on v6e/v7x
    # (v5e and older have no bf16 VPU/EUP).
    k = _device_kind()
    act = jnp.bfloat16 if ("v6" in k or "v7" in k or "7x" in k) else jnp.float32
    return jnp.bfloat16, act


def _choose_tile(n, tile_b, num_cores):
    n128 = _round_up(max(n, 1), 128)
    tile = max(128, min(_round_up(tile_b, 128), n128))
    if num_cores > 1:
        steps = pl.cdiv(n128, tile)
        if steps == 1 and tile >= 256:
            # split a single big tile so both TensorCores get work
            tile = _round_up(tile // 2, 128)
        elif steps > 1 and steps % 2 == 1:
            # an odd step count leaves one TensorCore idle on the tail step
            tile = _round_up(pl.cdiv(n128, steps + 1), 128)
    return tile


def mlp_forward(x, params, *, tile_b=2048, mxu_dtype=None, act_dtype=None):
    """x: (N, 3) float32.  params: [(W (out,in), b (out,)), ...].  Returns (N, 1)."""
    n, in_dim = x.shape
    (w1, b1), (w2, b2), (w3, b3), (w4, b4), (w5, b5) = params

    auto_mxu, auto_act = _default_dtypes()
    mxu_dtype = auto_mxu if mxu_dtype is None else mxu_dtype
    act_dtype = auto_act if act_dtype is None else act_dtype

    num_cores = _num_tensorcores()
    tile = _choose_tile(n, tile_b, num_cores)
    n_pad = _round_up(n, tile)
    grid = (n_pad // tile,)

    # Transposed, lane-dense input: (3, n_pad), padded batch columns are
    # garbage-but-finite and sliced off below.
    xt = jnp.pad(x.T.astype(jnp.float32), ((0, 0), (0, n_pad - n)))

    def col(b):  # biases as (out, 1) columns -> broadcast along lanes
        return b.reshape(-1, 1).astype(jnp.float32)

    # Layer 1 stays f32 (VPU path); MXU layers cast once on the host.
    flat_params = [w1.astype(jnp.float32), col(b1),
                   w2.astype(mxu_dtype), col(b2),
                   w3.astype(mxu_dtype), col(b3),
                   w4.astype(mxu_dtype), col(b4),
                   w5.astype(mxu_dtype), col(b5)]

    def full_spec(arr):
        # whole array resident in VMEM; identical block index every grid step.
        return pl.BlockSpec(arr.shape, lambda i: (0, 0))

    in_specs = [pl.BlockSpec((in_dim, tile), lambda i: (0, i))]
    in_specs += [full_spec(a) for a in flat_params]
    out_spec = pl.BlockSpec((1, tile), lambda i: (0, i))

    per_row_flops = 2 * (3 * 20 + 20 * 200 + 200 * 200 + 200 * 100 + 100 * 1)
    param_bytes = sum(int(a.size) * a.dtype.itemsize for a in flat_params)
    cost = pl.CostEstimate(
        flops=n_pad * per_row_flops,
        transcendentals=n_pad * (20 + 200 + 200),
        bytes_accessed=n_pad * (in_dim + 1) * 4 + param_bytes,
    )

    # VMEM sizing: x/out blocks (sublane-padded to 8, double-buffered) +
    # resident params (double-buffered) + live intermediates, with 2x margin.
    act_bytes = jnp.dtype(act_dtype).itemsize
    est = (2 * (8 * tile * 4) * 2
           + tile * (20 + 200 + 200 + 100) * (4 + act_bytes)
           + 2 * param_bytes)
    vmem_limit = int(min(48 << 20, max(32 << 20, 2 * est)))

    out = pl.pallas_call(
        functools.partial(mlp_kernel, act_dtype=act_dtype),
        out_shape=jax.ShapeDtypeStruct((1, n_pad), jnp.float32),
        grid=grid,
        in_specs=in_specs,
        out_specs=out_spec,
        compiler_params=pltpu.CompilerParams(
            dimension_semantics=("parallel",),
            vmem_limit_bytes=vmem_limit),
        cost_estimate=cost,
    )(xt, *flat_params)

    return out[:, :n].T          # (N, 1)


# --------------------------- parameter init --------------------------------

def xavier_uniform(key, fan_out, fan_in):
    # torch.nn.init.xavier_uniform with gain=1; PyTorch weight layout (out, in)
    bound = float(jnp.sqrt(6.0 / (fan_in + fan_out)))
    return jax.random.uniform(key, (fan_out, fan_in),
                              minval=-bound, maxval=bound, dtype=jnp.float32)


def linear_bias(key, fan_in, fan_out):
    # PyTorch nn.Linear default bias init: U(-1/sqrt(fan_in), 1/sqrt(fan_in))
    bound = 1.0 / float(jnp.sqrt(float(fan_in)))
    return jax.random.uniform(key, (fan_out,),
                              minval=-bound, maxval=bound, dtype=jnp.float32)


def init_params(key):
    sizes = [(3, 20), (20, 200), (200, 200), (200, 100), (100, 1)]
    params = []
    for (fi, fo) in sizes:
        key, kw, kb = jax.random.split(key, 3)
        params.append((xavier_uniform(kw, fo, fi), linear_bias(kb, fi, fo)))
    return params


# pure-JAX f32 reference (layer 1 written as FMAs to mirror the kernel's
# exact-f32 VPU formulation of the K=3 layer)
def mlp_ref(x, params):
    (w1, b1), (w2, b2), (w3, b3), (w4, b4), (w5, b5) = params
    h = jnp.tanh(x[:, 0:1] * w1[:, 0][None, :]
                 + x[:, 1:2] * w1[:, 1][None, :]
                 + x[:, 2:3] * w1[:, 2][None, :] + b1)
    h = jnp.tanh(h @ w2.T + b2)
    h = jnp.tanh(h @ w3.T + b3)
    h = jax.nn.relu(h @ w4.T + b4)
    return h @ w5.T + b5


if __name__ == "__main__":
    key = jax.random.PRNGKey(0)
    key, kx = jax.random.split(key)
    params = init_params(key)

    # small batch (single tile)
    x = jax.random.normal(kx, (8, 3), dtype=jnp.float32)
    ref = mlp_ref(x, params)

    # f32 path: tight structural check
    out_f32 = jax.block_until_ready(
        mlp_forward(x, params, mxu_dtype=jnp.float32, act_dtype=jnp.float32))
    assert out_f32.shape == (8, 1)
    assert jnp.allclose(out_f32, ref, atol=1e-3, rtol=1e-3)

    # default path (bf16 MXU; bf16 activations on v6e/v7x): loose sanity check
    out_def = jax.block_until_ready(mlp_forward(x, params))
    assert out_def.shape == (8, 1)
    assert jnp.allclose(out_def, ref, atol=1e-1, rtol=1e-1)

    # non-aligned batch: exercises wrapper-side padding and a multi-step grid
    x2 = jax.random.normal(jax.random.PRNGKey(1), (300, 3), dtype=jnp.float32)
    ref2 = mlp_ref(x2, params)
    out2 = jax.block_until_ready(
        mlp_forward(x2, params, tile_b=128,
                    mxu_dtype=jnp.float32, act_dtype=jnp.float32))
    assert out2.shape == (300, 1)
    assert jnp.allclose(out2, ref2, atol=1e-3, rtol=1e-3)

    out2_def = jax.block_until_ready(mlp_forward(x2, params))
    assert out2_def.shape == (300, 1)
    assert jnp.allclose(out2_def, ref2, atol=1e-1, rtol=1e-1)

    print("KERNEL_OK")
</pallas_src>

<mosaic_0001>
module attributes {stable_mosaic.version = 11 : i64} {
  func.func @mlp_kernel(%arg0: i32, %arg1: memref<3x128xf32, #tpu.memory_space<vmem>>, %arg2: memref<20x3xf32, #tpu.memory_space<vmem>>, %arg3: memref<20x1xf32, #tpu.memory_space<vmem>>, %arg4: memref<200x20xf32, #tpu.memory_space<vmem>>, %arg5: memref<200x1xf32, #tpu.memory_space<vmem>>, %arg6: memref<200x200xf32, #tpu.memory_space<vmem>>, %arg7: memref<200x1xf32, #tpu.memory_space<vmem>>, %arg8: memref<100x200xf32, #tpu.memory_space<vmem>>, %arg9: memref<100x1xf32, #tpu.memory_space<vmem>>, %arg10: memref<1x100xf32, #tpu.memory_space<vmem>>, %arg11: memref<1x1xf32, #tpu.memory_space<vmem>>, %arg12: memref<1x128xf32, #tpu.memory_space<vmem>>) attributes {dimension_semantics = [#tpu.dimension_semantics<parallel>], iteration_bounds = array<i64: 1>, scalar_prefetch = 0 : i64, scratch_operands = 0 : i64, tpu.core_type = #tpu.core_type<tc>, window_params = [{transform_indices = @transform_0, window_bounds = array<i64: 3, 128>}, {pipeline_mode = #tpu.pipeline_mode<synchronous>, transform_indices = @transform_1, window_bounds = array<i64: 20, 3>}, {pipeline_mode = #tpu.pipeline_mode<synchronous>, transform_indices = @transform_2, window_bounds = array<i64: 20, 1>}, {pipeline_mode = #tpu.pipeline_mode<synchronous>, transform_indices = @transform_3, window_bounds = array<i64: 200, 20>}, {pipeline_mode = #tpu.pipeline_mode<synchronous>, transform_indices = @transform_4, window_bounds = array<i64: 200, 1>}, {pipeline_mode = #tpu.pipeline_mode<synchronous>, transform_indices = @transform_5, window_bounds = array<i64: 200, 200>}, {pipeline_mode = #tpu.pipeline_mode<synchronous>, transform_indices = @transform_6, window_bounds = array<i64: 200, 1>}, {pipeline_mode = #tpu.pipeline_mode<synchronous>, transform_indices = @transform_7, window_bounds = array<i64: 100, 200>}, {pipeline_mode = #tpu.pipeline_mode<synchronous>, transform_indices = @transform_8, window_bounds = array<i64: 100, 1>}, {pipeline_mode = #tpu.pipeline_mode<synchronous>, transform_indices = @transform_9, window_bounds = array<i64: 1, 100>}, {pipeline_mode = #tpu.pipeline_mode<synchronous>, transform_indices = @transform_10, window_bounds = array<i64: 1, 1>}, {transform_indices = @transform_11, window_bounds = array<i64: 1, 128>}]} {
    %c0 = arith.constant 0 : index
    %c0_0 = arith.constant 0 : index
    %0 = vector.load %arg1[%c0, %c0_0] : memref<3x128xf32, #tpu.memory_space<vmem>>, vector<3x128xf32>
    %c0_1 = arith.constant 0 : index
    %c0_2 = arith.constant 0 : index
    %1 = vector.load %arg2[%c0_1, %c0_2] : memref<20x3xf32, #tpu.memory_space<vmem>>, vector<20x3xf32>
    %2 = vector.extract_strided_slice %1 {offsets = [0, 0], sizes = [20, 1], strides = [1, 1]} : vector<20x3xf32> to vector<20x1xf32>
    %3 = vector.extract_strided_slice %0 {offsets = [0, 0], sizes = [1, 128], strides = [1, 1]} : vector<3x128xf32> to vector<1x128xf32>
    %4 = vector.broadcast %2 : vector<20x1xf32> to vector<20x128xf32>
    %5 = vector.broadcast %3 : vector<1x128xf32> to vector<20x128xf32>
    %6 = arith.mulf %4, %5 : vector<20x128xf32>
    %7 = vector.extract_strided_slice %1 {offsets = [0, 1], sizes = [20, 1], strides = [1, 1]} : vector<20x3xf32> to vector<20x1xf32>
    %8 = vector.extract_strided_slice %0 {offsets = [1, 0], sizes = [1, 128], strides = [1, 1]} : vector<3x128xf32> to vector<1x128xf32>
    %9 = vector.broadcast %7 : vector<20x1xf32> to vector<20x128xf32>
    %10 = vector.broadcast %8 : vector<1x128xf32> to vector<20x128xf32>
    %11 = arith.mulf %9, %10 : vector<20x128xf32>
    %12 = arith.addf %6, %11 : vector<20x128xf32>
    %13 = vector.extract_strided_slice %1 {offsets = [0, 2], sizes = [20, 1], strides = [1, 1]} : vector<20x3xf32> to vector<20x1xf32>
    %14 = vector.extract_strided_slice %0 {offsets = [2, 0], sizes = [1, 128], strides = [1, 1]} : vector<3x128xf32> to vector<1x128xf32>
    %15 = vector.broadcast %13 : vector<20x1xf32> to vector<20x128xf32>
    %16 = vector.broadcast %14 : vector<1x128xf32> to vector<20x128xf32>
    %17 = arith.mulf %15, %16 : vector<20x128xf32>
    %18 = arith.addf %12, %17 : vector<20x128xf32>
    %c0_3 = arith.constant 0 : index
    %c0_4 = arith.constant 0 : index
    %19 = vector.load %arg3[%c0_3, %c0_4] : memref<20x1xf32, #tpu.memory_space<vmem>>, vector<20x1xf32>
    %20 = vector.broadcast %19 : vector<20x1xf32> to vector<20x128xf32>
    %21 = arith.addf %18, %20 : vector<20x128xf32>
    %22 = math.tanh %21 : vector<20x128xf32>
    %c0_5 = arith.constant 0 : index
    %c0_6 = arith.constant 0 : index
    %23 = vector.load %arg4[%c0_5, %c0_6] : memref<200x20xf32, #tpu.memory_space<vmem>>, vector<200x20xf32>
    %cst = arith.constant dense<0.000000e+00> : vector<200x128xf32>
    %24 = tpu.matmul %23, %22, %cst {dimension_numbers = #tpu.dot_dimension_numbers<[1], [0], [0], [1], [0, 0, 1, 1], [], []>} : vector<200x20xf32>, vector<20x128xf32>, vector<200x128xf32> -> vector<200x128xf32>
    %c0_7 = arith.constant 0 : index
    %c0_8 = arith.constant 0 : index
    %25 = vector.load %arg5[%c0_7, %c0_8] : memref<200x1xf32, #tpu.memory_space<vmem>>, vector<200x1xf32>
    %26 = vector.broadcast %25 : vector<200x1xf32> to vector<200x128xf32>
    %27 = arith.addf %24, %26 : vector<200x128xf32>
    %28 = math.tanh %27 : vector<200x128xf32>
    %c0_9 = arith.constant 0 : index
    %c0_10 = arith.constant 0 : index
    %29 = vector.load %arg6[%c0_9, %c0_10] : memref<200x200xf32, #tpu.memory_space<vmem>>, vector<200x200xf32>
    %cst_11 = arith.constant dense<0.000000e+00> : vector<200x128xf32>
    %30 = tpu.matmul %29, %28, %cst_11 {dimension_numbers = #tpu.dot_dimension_numbers<[1], [0], [0], [1], [0, 0, 1, 1], [], []>} : vector<200x200xf32>, vector<200x128xf32>, vector<200x128xf32> -> vector<200x128xf32>
    %c0_12 = arith.constant 0 : index
    %c0_13 = arith.constant 0 : index
    %31 = vector.load %arg7[%c0_12, %c0_13] : memref<200x1xf32, #tpu.memory_space<vmem>>, vector<200x1xf32>
    %32 = vector.broadcast %31 : vector<200x1xf32> to vector<200x128xf32>
    %33 = arith.addf %30, %32 : vector<200x128xf32>
    %34 = math.tanh %33 : vector<200x128xf32>
    %c0_14 = arith.constant 0 : index
    %c0_15 = arith.constant 0 : index
    %35 = vector.load %arg8[%c0_14, %c0_15] : memref<100x200xf32, #tpu.memory_space<vmem>>, vector<100x200xf32>
    %cst_16 = arith.constant dense<0.000000e+00> : vector<100x128xf32>
    %36 = tpu.matmul %35, %34, %cst_16 {dimension_numbers = #tpu.dot_dimension_numbers<[1], [0], [0], [1], [0, 0, 1, 1], [], []>} : vector<100x200xf32>, vector<200x128xf32>, vector<100x128xf32> -> vector<100x128xf32>
    %c0_17 = arith.constant 0 : index
    %c0_18 = arith.constant 0 : index
    %37 = vector.load %arg9[%c0_17, %c0_18] : memref<100x1xf32, #tpu.memory_space<vmem>>, vector<100x1xf32>
    %38 = vector.broadcast %37 : vector<100x1xf32> to vector<100x128xf32>
    %39 = arith.addf %36, %38 : vector<100x128xf32>
    %cst_19 = arith.constant 0.000000e+00 : f32
    %40 = vector.broadcast %cst_19 : f32 to vector<100x128xf32>
    %41 = arith.maximumf %39, %40 : vector<100x128xf32>
    %c0_20 = arith.constant 0 : index
    %c0_21 = arith.constant 0 : index
    %42 = vector.load %arg10[%c0_20, %c0_21] : memref<1x100xf32, #tpu.memory_space<vmem>>, vector<1x100xf32>
    %cst_22 = arith.constant dense<0.000000e+00> : vector<1x128xf32>
    %43 = tpu.matmul %42, %41, %cst_22 {dimension_numbers = #tpu.dot_dimension_numbers<[1], [0], [0], [1], [0, 0, 1, 1], [], []>} : vector<1x100xf32>, vector<100x128xf32>, vector<1x128xf32> -> vector<1x128xf32>
    %c0_23 = arith.constant 0 : index
    %c0_24 = arith.constant 0 : index
    %44 = vector.load %arg11[%c0_23, %c0_24] : memref<1x1xf32, #tpu.memory_space<vmem>>, vector<1x1xf32>
    %45 = vector.broadcast %44 : vector<1x1xf32> to vector<1x128xf32>
    %46 = arith.addf %43, %45 : vector<1x128xf32>
    %c0_25 = arith.constant 0 : index
    %c0_26 = arith.constant 0 : index
    %47 = vector.load %arg12[%c0_25, %c0_26] : memref<1x128xf32, #tpu.memory_space<vmem>>, vector<1x128xf32>
    tpu.vector_store %arg12[%c0_25, %c0_26], %46 {strides = array<i32>} : memref<1x128xf32, #tpu.memory_space<vmem>>, vector<1x128xf32>,
    return
  }
  func.func @transform_0(%arg0: i32) -> (i32, i32) {
    %c0_i32 = arith.constant 0 : i32
    %c0_i32_0 = arith.constant 0 : i32
    return %c0_i32, %arg0 : i32, i32
  }
  func.func @transform_1(%arg0: i32) -> (i32, i32) {
    %c0_i32 = arith.constant 0 : i32
    %c0_i32_0 = arith.constant 0 : i32
    %c0_i32_1 = arith.constant 0 : i32
    return %c0_i32, %c0_i32_0 : i32, i32
  }
  func.func @transform_2(%arg0: i32) -> (i32, i32) {
    %c0_i32 = arith.constant 0 : i32
    %c0_i32_0 = arith.constant 0 : i32
    %c0_i32_1 = arith.constant 0 : i32
    return %c0_i32, %c0_i32_0 : i32, i32
  }
  func.func @transform_3(%arg0: i32) -> (i32, i32) {
    %c0_i32 = arith.constant 0 : i32
    %c0_i32_0 = arith.constant 0 : i32
    %c0_i32_1 = arith.constant 0 : i32
    return %c0_i32, %c0_i32_0 : i32, i32
  }
  func.func @transform_4(%arg0: i32) -> (i32, i32) {
    %c0_i32 = arith.constant 0 : i32
    %c0_i32_0 = arith.constant 0 : i32
    %c0_i32_1 = arith.constant 0 : i32
    return %c0_i32, %c0_i32_0 : i32, i32
  }
  func.func @transform_5(%arg0: i32) -> (i32, i32) {
    %c0_i32 = arith.constant 0 : i32
    %c0_i32_0 = arith.constant 0 : i32
    %c0_i32_1 = arith.constant 0 : i32
    return %c0_i32, %c0_i32_0 : i32, i32
  }
  func.func @transform_6(%arg0: i32) -> (i32, i32) {
    %c0_i32 = arith.constant 0 : i32
    %c0_i32_0 = arith.constant 0 : i32
    %c0_i32_1 = arith.constant 0 : i32
    return %c0_i32, %c0_i32_0 : i32, i32
  }
  func.func @transform_7(%arg0: i32) -> (i32, i32) {
    %c0_i32 = arith.constant 0 : i32
    %c0_i32_0 = arith.constant 0 : i32
    %c0_i32_1 = arith.constant 0 : i32
    return %c0_i32, %c0_i32_0 : i32, i32
  }
  func.func @transform_8(%arg0: i32) -> (i32, i32) {
    %c0_i32 = arith.constant 0 : i32
    %c0_i32_0 = arith.constant 0 : i32
    %c0_i32_1 = arith.constant 0 : i32
    return %c0_i32, %c0_i32_0 : i32, i32
  }
  func.func @transform_9(%arg0: i32) -> (i32, i32) {
    %c0_i32 = arith.constant 0 : i32
    %c0_i32_0 = arith.constant 0 : i32
    %c0_i32_1 = arith.constant 0 : i32
    return %c0_i32, %c0_i32_0 : i32, i32
  }
  func.func @transform_10(%arg0: i32) -> (i32, i32) {
    %c0_i32 = arith.constant 0 : i32
    %c0_i32_0 = arith.constant 0 : i32
    %c0_i32_1 = arith.constant 0 : i32
    return %c0_i32, %c0_i32_0 : i32, i32
  }
  func.func @transform_11(%arg0: i32) -> (i32, i32) {
    %c0_i32 = arith.constant 0 : i32
    %c0_i32_0 = arith.constant 0 : i32
    return %c0_i32, %arg0 : i32, i32
  }
}

</mosaic_0001>

<llo_original>
// kernel: tpu_custom_call.1
$region0: #{tpu_custom_call.1}
  #allocation0 [shape = 'u32[]', space=smem, size = 0x4, offset = 0x4, fixed_abs, tag = 'smem constant byte address 0x4 - core index']
  #allocation1 [shape = 'u32[144,128]{1,0:T(1,128)}', space=vmem, size = 0x12000, scoped, tag = 'internal scratch']
  #allocation2 [shape = 'f32[1,1]{1,0:T(1,128)S(1)}', space=vmem, size = 0x200, scoped, tag = 'scoped memory for tpu_custom_call.1']
  %s0 = inlined_call_operand.vmem [shape: f32[3,128], index: 0, kind: input, shape index: {}]
  %s1 = inlined_call_operand.vmem [shape: f32[20,3], index: 1, kind: input, shape index: {}]
  %s2 = inlined_call_operand.vmem [shape: f32[20,1], index: 2, kind: input, shape index: {}]
  %s3 = inlined_call_operand.vmem [shape: f32[200,20], index: 3, kind: input, shape index: {}]
  %s4 = inlined_call_operand.vmem [shape: f32[200,1], index: 4, kind: input, shape index: {}]
  %s5 = inlined_call_operand.vmem [shape: f32[200,200], index: 5, kind: input, shape index: {}]
  %s6 = inlined_call_operand.vmem [shape: f32[200,1], index: 6, kind: input, shape index: {}]
  %s7 = inlined_call_operand.vmem [shape: f32[100,200], index: 7, kind: input, shape index: {}]
  %s8 = inlined_call_operand.vmem [shape: f32[100,1], index: 8, kind: input, shape index: {}]
  %s9 = inlined_call_operand.vmem [shape: f32[1,100], index: 9, kind: input, shape index: {}]
  %s10 = inlined_call_operand.<no memory space> [shape: f32[1,1], index: 10, kind: input, shape index: {}]
  %s11 = inlined_call_operand.hbm [shape: f32[1,128], index: 11, kind: output, shape index: {}]
  %s12 = sld [smem:[#allocation0]]
  $region54: #{tpu_custom_call.1} parent=0
    _
  %s14 = ssub.s32 1, %s12
  %s15 = scalar_select 0, %s14, %s12
  %v16 = vstv %s10
  %17 = vst [vmem:[#allocation2] sm:$0x1] %v16
  $region1: #{tpu_custom_call.1} parent=0
    #allocation3 [shape = 'u8[512]{0}', space=vmem, size = 0x400, scoped, tag = 'output window, operand 0, single buffered']
    #allocation4 [shape = 's32[1]{0}', space=sflag, size = 0x4, scoped, tag = 'scoped memory for tpu_custom_call.1']
    %18 = vsyncpa [#allocation4], 0
    // Predicated region
    $region2: #{tpu_custom_call.1} parent=1 // pred_check
      _
    $region3: #{tpu_custom_call.1} parent=1 // pred_check_branch
      %20 = sbr.rel (0) target = $region5
    $region4: #{tpu_custom_call.1} parent=1 // pred_region
      _
    $region5: #{tpu_custom_call.1} parent=1 // pred_fallthru
      _
    // Predicated region
    $region6: #{tpu_custom_call.1} parent=1 // pred_check
      _
    $region7: #{tpu_custom_call.1} parent=1 // pred_check_branch
      %22 = sbr.rel (0) target = $region9
    $region8: #{tpu_custom_call.1} parent=1 // pred_region
      _
    $region9: #{tpu_custom_call.1} parent=1 // pred_fallthru
      _
    // Predicated region
    $region10: #{tpu_custom_call.1} parent=1 // pred_check
      _
    $region11: #{tpu_custom_call.1} parent=1 // pred_check_branch
      %24 = sbr.rel (0) target = $region13
    $region12: #{tpu_custom_call.1} parent=1 // pred_region
      _
    $region13: #{tpu_custom_call.1} parent=1 // pred_fallthru
      _
    // Predicated region
    $region14: #{tpu_custom_call.1} parent=1 // pred_check
      _
    $region15: #{tpu_custom_call.1} parent=1 // pred_check_branch
      %26 = sbr.rel (0) target = $region17
    $region16: #{tpu_custom_call.1} parent=1 // pred_region
      _
    $region17: #{tpu_custom_call.1} parent=1 // pred_fallthru
      _
    // Predicated region
    $region18: #{tpu_custom_call.1} parent=1 // pred_check
      _
    $region19: #{tpu_custom_call.1} parent=1 // pred_check_branch
      %28 = sbr.rel (0) target = $region21
    $region20: #{tpu_custom_call.1} parent=1 // pred_region
      _
    $region21: #{tpu_custom_call.1} parent=1 // pred_fallthru
      _
    // Predicated region
    $region22: #{tpu_custom_call.1} parent=1 // pred_check
      _
    $region23: #{tpu_custom_call.1} parent=1 // pred_check_branch
      %30 = sbr.rel (0) target = $region25
    $region24: #{tpu_custom_call.1} parent=1 // pred_region
      _
    $region25: #{tpu_custom_call.1} parent=1 // pred_fallthru
      _
    // Predicated region
    $region26: #{tpu_custom_call.1} parent=1 // pred_check
      _
    $region27: #{tpu_custom_call.1} parent=1 // pred_check_branch
      %32 = sbr.rel (0) target = $region29
    $region28: #{tpu_custom_call.1} parent=1 // pred_region
      _
    $region29: #{tpu_custom_call.1} parent=1 // pred_fallthru
      _
    // Predicated region
    $region30: #{tpu_custom_call.1} parent=1 // pred_check
      _
    $region31: #{tpu_custom_call.1} parent=1 // pred_check_branch
      %34 = sbr.rel (0) target = $region33
    $region32: #{tpu_custom_call.1} parent=1 // pred_region
      _
    $region33: #{tpu_custom_call.1} parent=1 // pred_fallthru
      _
    // Predicated region
    $region34: #{tpu_custom_call.1} parent=1 // pred_check
      _
    $region35: #{tpu_custom_call.1} parent=1 // pred_check_branch
      %36 = sbr.rel (0) target = $region37
    $region36: #{tpu_custom_call.1} parent=1 // pred_region
      _
    $region37: #{tpu_custom_call.1} parent=1 // pred_fallthru
      _
    // Predicated region
    $region38: #{tpu_custom_call.1} parent=1 // pred_check
      _
    $region39: #{tpu_custom_call.1} parent=1 // pred_check_branch
      %38 = sbr.rel (0) target = $region41
    $region40: #{tpu_custom_call.1} parent=1 // pred_region
      _
    $region41: #{tpu_custom_call.1} parent=1 // pred_fallthru
      _
    // Predicated region
    $region42: #{tpu_custom_call.1} parent=1 // pred_check
      _
    $region43: #{tpu_custom_call.1} parent=1 // pred_check_branch
      %40 = sbr.rel (0) target = $region45
    $region44: #{tpu_custom_call.1} parent=1 // pred_region
      _
    $region45: #{tpu_custom_call.1} parent=1 // pred_fallthru
      _
    %v41 = vld [vmem:[%s0] sm:$0x7]
    %v42 = vld [vmem:[%s1] sm:$0xff]
    %v43 = vld [vmem:[%s1 + $0x8] sm:$0xff]
    %v44 = vld [vmem:[%s1 + $0x10] sm:$0xf]
    %46 = vset.pattern.permute.xlu0 0
    %47 = vperm.xlu0 %46, %v42
    %v48 = vpop.permute.xlu0 %47
    %51 = vset.pattern.permute.xlu0 0
    %52 = vperm.xlu0 %51, %v43
    %v53 = vpop.permute.xlu0 %52
    %56 = vset.pattern.permute.xlu0 0
    %57 = vperm.xlu0 %56, %v44
    %v58 = vpop.permute.xlu0 %57
    %v60 = vlaneseq
    %v61 = vshrl.u32 %v60, 7
    %v62 = vsub.s32 0, %v61
    %v63 = vrot.slane %v41, %v62
    %v64 = vmul.f32 %v48, %v63
    %v65 = vmul.f32 %v53, %v63
    %v66 = vmul.f32 %v58, %v63
    %67 = vset.pattern.permute.xlu0 1
    %68 = vperm.xlu0 %67, %v42
    %v69 = vpop.permute.xlu0 %68
    %71 = vset.pattern.permute.xlu0 1
    %72 = vperm.xlu0 %71, %v43
    %v73 = vpop.permute.xlu0 %72
    %75 = vset.pattern.permute.xlu0 1
    %76 = vperm.xlu0 %75, %v44
    %v77 = vpop.permute.xlu0 %76
    %v79 = vlaneseq
    %v80 = vshrl.u32 %v79, 7
    %v81 = vsub.s32 1, %v80
    %v82 = vrot.slane %v41, %v81
    %v83 = vmul.f32 %v69, %v82
    %v84 = vmul.f32 %v73, %v82
    %v85 = vmul.f32 %v77, %v82
    %v86 = vadd.f32 %v64, %v83
    %v87 = vadd.f32 %v65, %v84
    %v88 = vadd.f32 %v66, %v85
    %89 = vset.pattern.permute.xlu0 2
    %90 = vperm.xlu0 %89, %v42
    %v91 = vpop.permute.xlu0 %90
    %93 = vset.pattern.permute.xlu0 2
    %94 = vperm.xlu0 %93, %v43
    %v95 = vpop.permute.xlu0 %94
    %97 = vset.pattern.permute.xlu0 2
    %98 = vperm.xlu0 %97, %v44
    %v99 = vpop.permute.xlu0 %98
    %v101 = vlaneseq
    %v102 = vshrl.u32 %v101, 7
    %v103 = vsub.s32 2, %v102
    %v104 = vrot.slane %v41, %v103
    %v105 = vmul.f32 %v91, %v104
    %v106 = vmul.f32 %v95, %v104
    %v107 = vmul.f32 %v99, %v104
    %v108 = vadd.f32 %v86, %v105
    %v109 = vadd.f32 %v87, %v106
    %v110 = vadd.f32 %v88, %v107
    %v111 = vld [vmem:[%s2] sm:$0xff]
    %v112 = vld [vmem:[%s2 + $0x8] sm:$0xff]
    %v113 = vld [vmem:[%s2 + $0x10] sm:$0xf]
    %115 = vset.pattern.permute.xlu0 0
    %116 = vperm.xlu0 %115, %v111
    %v117 = vpop.permute.xlu0 %116
    %120 = vset.pattern.permute.xlu0 0
    %121 = vperm.xlu0 %120, %v112
    %v122 = vpop.permute.xlu0 %121
    %125 = vset.pattern.permute.xlu0 0
    %126 = vperm.xlu0 %125, %v113
    %v127 = vpop.permute.xlu0 %126
    %v129 = vadd.f32 %v108, %v117
    %v130 = vadd.f32 %v109, %v122
    %v131 = vadd.f32 %v110, %v127
    %v132 = vtanh.pop %v129
    %v133 = vtanh.pop %v130
    %v134 = vtanh.pop %v131
    %v135 = vld [vmem:[%s3] sm:$0xff]
    %v136 = vld [vmem:[%s3 + $0x8] sm:$0xff]
    %v137 = vld [vmem:[%s3 + $0x10] sm:$0xff]
    %v138 = vld [vmem:[%s3 + $0x18] sm:$0xff]
    %v139 = vld [vmem:[%s3 + $0x20] sm:$0xff]
    %v140 = vld [vmem:[%s3 + $0x28] sm:$0xff]
    %v141 = vld [vmem:[%s3 + $0x30] sm:$0xff]
    %v142 = vld [vmem:[%s3 + $0x38] sm:$0xff]
    %v143 = vld [vmem:[%s3 + $0x40] sm:$0xff]
    %v144 = vld [vmem:[%s3 + $0x48] sm:$0xff]
    %v145 = vld [vmem:[%s3 + $0x50] sm:$0xff]
    %v146 = vld [vmem:[%s3 + $0x58] sm:$0xff]
    %v147 = vld [vmem:[%s3 + $0x60] sm:$0xff]
    %v148 = vld [vmem:[%s3 + $0x68] sm:$0xff]
    %v149 = vld [vmem:[%s3 + $0x70] sm:$0xff]
    %v150 = vld [vmem:[%s3 + $0x78] sm:$0xff]
    %v151 = vld [vmem:[%s3 + $0x80] sm:$0xff]
    %v152 = vld [vmem:[%s3 + $0x88] sm:$0xff]
    %v153 = vld [vmem:[%s3 + $0x90] sm:$0xff]
    %v154 = vld [vmem:[%s3 + $0x98] sm:$0xff]
    %v155 = vld [vmem:[%s3 + $0xa0] sm:$0xff]
    %v156 = vld [vmem:[%s3 + $0xa8] sm:$0xff]
    %v157 = vld [vmem:[%s3 + $0xb0] sm:$0xff]
    %v158 = vld [vmem:[%s3 + $0xb8] sm:$0xff]
    %v159 = vld [vmem:[%s3 + $0xc0] sm:$0xff]
    %v160 = vld [vmem:[%s4] sm:$0xff]
    %v161 = vld [vmem:[%s4 + $0x8] sm:$0xff]
    %v162 = vld [vmem:[%s4 + $0x10] sm:$0xff]
    %v163 = vld [vmem:[%s4 + $0x18] sm:$0xff]
    %v164 = vld [vmem:[%s4 + $0x20] sm:$0xff]
    %v165 = vld [vmem:[%s4 + $0x28] sm:$0xff]
    %v166 = vld [vmem:[%s4 + $0x30] sm:$0xff]
    %v167 = vld [vmem:[%s4 + $0x38] sm:$0xff]
    %v168 = vld [vmem:[%s4 + $0x40] sm:$0xff]
    %v169 = vld [vmem:[%s4 + $0x48] sm:$0xff]
    %v170 = vld [vmem:[%s4 + $0x50] sm:$0xff]
    %v171 = vld [vmem:[%s4 + $0x58] sm:$0xff]
    %v172 = vld [vmem:[%s4 + $0x60] sm:$0xff]
    %v173 = vld [vmem:[%s4 + $0x68] sm:$0xff]
    %v174 = vld [vmem:[%s4 + $0x70] sm:$0xff]
    %v175 = vld [vmem:[%s4 + $0x78] sm:$0xff]
    %v176 = vld [vmem:[%s4 + $0x80] sm:$0xff]
    %v177 = vld [vmem:[%s4 + $0x88] sm:$0xff]
    %v178 = vld [vmem:[%s4 + $0x90] sm:$0xff]
    %v179 = vld [vmem:[%s4 + $0x98] sm:$0xff]
    %v180 = vld [vmem:[%s4 + $0xa0] sm:$0xff]
    %v181 = vld [vmem:[%s4 + $0xa8] sm:$0xff]
    %v182 = vld [vmem:[%s4 + $0xb0] sm:$0xff]
    %v183 = vld [vmem:[%s4 + $0xb8] sm:$0xff]
    %v184 = vld [vmem:[%s4 + $0xc0] sm:$0xff]
    %186 = vset.pattern.permute.xlu0 0
    %187 = vperm.xlu0 %186, %v160
    %v188 = vpop.permute.xlu0 %187
    %191 = vset.pattern.permute.xlu0 0
    %192 = vperm.xlu0 %191, %v161
    %v193 = vpop.permute.xlu0 %192
    %196 = vset.pattern.permute.xlu0 0
    %197 = vperm.xlu0 %196, %v162
    %v198 = vpop.permute.xlu0 %197
    %201 = vset.pattern.permute.xlu0 0
    %202 = vperm.xlu0 %201, %v163
    %v203 = vpop.permute.xlu0 %202
    %206 = vset.pattern.permute.xlu0 0
    %207 = vperm.xlu0 %206, %v164
    %v208 = vpop.permute.xlu0 %207
    %211 = vset.pattern.permute.xlu0 0
    %212 = vperm.xlu0 %211, %v165
    %v213 = vpop.permute.xlu0 %212
    %216 = vset.pattern.permute.xlu0 0
    %217 = vperm.xlu0 %216, %v166
    %v218 = vpop.permute.xlu0 %217
    %221 = vset.pattern.permute.xlu0 0
    %222 = vperm.xlu0 %221, %v167
    %v223 = vpop.permute.xlu0 %222
    %226 = vset.pattern.permute.xlu0 0
    %227 = vperm.xlu0 %226, %v168
    %v228 = vpop.permute.xlu0 %227
    %231 = vset.pattern.permute.xlu0 0
    %232 = vperm.xlu0 %231, %v169
    %v233 = vpop.permute.xlu0 %232
    %236 = vset.pattern.permute.xlu0 0
    %237 = vperm.xlu0 %236, %v170
    %v238 = vpop.permute.xlu0 %237
    %241 = vset.pattern.permute.xlu0 0
    %242 = vperm.xlu0 %241, %v171
    %v243 = vpop.permute.xlu0 %242
    %246 = vset.pattern.permute.xlu0 0
    %247 = vperm.xlu0 %246, %v172
    %v248 = vpop.permute.xlu0 %247
    %251 = vset.pattern.permute.xlu0 0
    %252 = vperm.xlu0 %251, %v173
    %v253 = vpop.permute.xlu0 %252
    %256 = vset.pattern.permute.xlu0 0
    %257 = vperm.xlu0 %256, %v174
    %v258 = vpop.permute.xlu0 %257
    %261 = vset.pattern.permute.xlu0 0
    %262 = vperm.xlu0 %261, %v175
    %v263 = vpop.permute.xlu0 %262
    %266 = vset.pattern.permute.xlu0 0
    %267 = vperm.xlu0 %266, %v176
    %v268 = vpop.permute.xlu0 %267
    %271 = vset.pattern.permute.xlu0 0
    %272 = vperm.xlu0 %271, %v177
    %v273 = vpop.permute.xlu0 %272
    %276 = vset.pattern.permute.xlu0 0
    %277 = vperm.xlu0 %276, %v178
    %v278 = vpop.permute.xlu0 %277
    %281 = vset.pattern.permute.xlu0 0
    %282 = vperm.xlu0 %281, %v179
    %v283 = vpop.permute.xlu0 %282
    %286 = vset.pattern.permute.xlu0 0
    %287 = vperm.xlu0 %286, %v180
    %v288 = vpop.permute.xlu0 %287
    %291 = vset.pattern.permute.xlu0 0
    %292 = vperm.xlu0 %291, %v181
    %v293 = vpop.permute.xlu0 %292
    %296 = vset.pattern.permute.xlu0 0
    %297 = vperm.xlu0 %296, %v182
    %v298 = vpop.permute.xlu0 %297
    %301 = vset.pattern.permute.xlu0 0
    %302 = vperm.xlu0 %301, %v183
    %v303 = vpop.permute.xlu0 %302
    %306 = vset.pattern.permute.xlu0 0
    %307 = vperm.xlu0 %306, %v184
    %v308 = vpop.permute.xlu0 %307
    %vm310 = vcmask 162816
    %v312 = vsel %vm310, %v135, 0
    %v315 = vsel %vm310, %v136, 0
    %v318 = vsel %vm310, %v137, 0
    %v321 = vsel %vm310, %v138, 0
    %v324 = vsel %vm310, %v139, 0
    %v327 = vsel %vm310, %v140, 0
    %v330 = vsel %vm310, %v141, 0
    %v333 = vsel %vm310, %v142, 0
    %v336 = vsel %vm310, %v143, 0
    %v339 = vsel %vm310, %v144, 0
    %v342 = vsel %vm310, %v145, 0
    %v345 = vsel %vm310, %v146, 0
    %v348 = vsel %vm310, %v147, 0
    %v351 = vsel %vm310, %v148, 0
    %v354 = vsel %vm310, %v149, 0
    %v357 = vsel %vm310, %v150, 0
    %v360 = vsel %vm310, %v151, 0
    %v363 = vsel %vm310, %v152, 0
    %v366 = vsel %vm310, %v153, 0
    %v369 = vsel %vm310, %v154, 0
    %v372 = vsel %vm310, %v155, 0
    %v375 = vsel %vm310, %v156, 0
    %v378 = vsel %vm310, %v157, 0
    %v381 = vsel %vm310, %v158, 0
    %v384 = vsel %vm310, %v159, 0
    %vm386 = vcmask 1043456
    %v388 = vsel %vm386, %v134, 0
    %390 = vmatprep.subr.mxu0 0.0
    %391 = vmatpush1.msra.mxu0 0.0
    %392 = vmatprep.subr.mxu0 0.0
    %393 = vmatpush1.msra.mxu0 0.0
    %394 = vmatprep.subr.mxu0 0.0
    %395 = vmatpush1.msra.mxu0 0.0
    %396 = vmatprep.subr.mxu0 0.0
    %397 = vmatpush1.msra.mxu0 0.0
    %398 = vmatprep.subr.mxu0 0.0
    %399 = vmatpush1.msra.mxu0 0.0
    %400 = vmatprep.subr.mxu0 0.0
    %401 = vmatpush1.msra.mxu0 0.0
    %402 = vmatprep.subr.mxu0 0.0
    %403 = vmatpush1.msra.mxu0 0.0
    %404 = vmatprep.subr.mxu0 0.0
    %405 = vmatpush1.msra.mxu0 0.0
    %406 = vmatprep.subr.mxu0 0.0
    %407 = vmatpush1.msra.mxu0 0.0
    %408 = vmatprep.subr.mxu0 0.0
    %409 = vmatpush1.msra.mxu0 0.0
    %410 = vmatprep.subr.mxu0 0.0
    %411 = vmatpush1.msra.mxu0 0.0
    %412 = vmatprep.subr.mxu0 0.0
    %413 = vmatpush1.msra.mxu0 0.0
    %414 = vmatprep.subr.mxu0 0.0
    %415 = vmatpush1.msra.mxu0 0.0
    %416 = vmatprep.subr.mxu0 0.0
    %417 = vmatpush1.msra.mxu0 %v388
    %418 = vmatprep.subr.mxu0 0.0
    %419 = vmatpush1.msra.mxu0 %v133
    %420 = vmatprep.subr.mxu0 0.0
    %421 = vmatpush1.msra.mxu0 %v132
    %422 = vmatprep.subr.mxu0 0.0
    %423 = vmatpush2.msra.mxu0 0.0
    %424 = vmatprep.subr.mxu0 0.0
    %425 = vmatpush2.msra.mxu0 0.0
    %426 = vmatprep.subr.mxu0 0.0
    %427 = vmatpush2.msra.mxu0 0.0
    %428 = vmatprep.subr.mxu0 0.0
    %429 = vmatpush2.msra.mxu0 0.0
    %430 = vmatprep.subr.mxu0 0.0
    %431 = vmatpush2.msra.mxu0 0.0
    %432 = vmatprep.subr.mxu0 0.0
    %433 = vmatpush2.msra.mxu0 0.0
    %434 = vmatprep.subr.mxu0 0.0
    %435 = vmatpush2.msra.mxu0 0.0
    %436 = vmatprep.subr.mxu0 0.0
    %437 = vmatpush2.msra.mxu0 0.0
    %438 = vmatprep.subr.mxu0 0.0
    %439 = vmatpush2.msra.mxu0 0.0
    %440 = vmatprep.subr.mxu0 0.0
    %441 = vmatpush2.msra.mxu0 0.0
    %442 = vmatprep.subr.mxu0 0.0
    %443 = vmatpush2.msra.mxu0 0.0
    %444 = vmatprep.subr.mxu0 0.0
    %445 = vmatpush2.msra.mxu0 0.0
    %446 = vmatprep.subr.mxu0 0.0
    %447 = vmatpush2.msra.mxu0 0.0
    %448 = vmatprep.subr.mxu0 0.0
    %449 = vmatpush2.msra.mxu0 0.0
    %450 = vmatprep.subr.mxu0 0.0
    %451 = vmatpush2.msra.mxu0 0.0
    %452 = vmatprep.subr.mxu0 0.0
    %453 = vmatpush2.msra.mxu0 0.0
    %454 = vmatprep.mubr.f32.mxu0 0.0
    %455 = vmatmul.mubr.f32.gmra.mxu0 %v312
    %v456 = vpop.f32.mrf.mxu0
    %v457 = vadd.f32 %v188, %v456
    %v458 = vpop.f32.mrf.mxu0
    %459 = vmatprep.mubr.f32.mxu0 0.0
    %460 = vmatmul.mubr.f32.gmra.mxu0 %v315
    %v461 = vpop.f32.mrf.mxu0
    %v462 = vadd.f32 %v193, %v461
    %v463 = vpop.f32.mrf.mxu0
    %464 = vmatprep.mubr.f32.mxu0 0.0
    %465 = vmatmul.mubr.f32.gmra.mxu0 %v318
    %v466 = vpop.f32.mrf.mxu0
    %v467 = vadd.f32 %v198, %v466
    %v468 = vpop.f32.mrf.mxu0
    %469 = vmatprep.mubr.f32.mxu0 0.0
    %470 = vmatmul.mubr.f32.gmra.mxu0 %v321
    %v471 = vpop.f32.mrf.mxu0
    %v472 = vadd.f32 %v203, %v471
    %v473 = vpop.f32.mrf.mxu0
    %474 = vmatprep.mubr.f32.mxu0 0.0
    %475 = vmatmul.mubr.f32.gmra.mxu0 %v324
    %v476 = vpop.f32.mrf.mxu0
    %v477 = vadd.f32 %v208, %v476
    %v478 = vpop.f32.mrf.mxu0
    %479 = vmatprep.mubr.f32.mxu0 0.0
    %480 = vmatmul.mubr.f32.gmra.mxu0 %v327
    %v481 = vpop.f32.mrf.mxu0
    %v482 = vadd.f32 %v213, %v481
    %v483 = vpop.f32.mrf.mxu0
    %484 = vmatprep.mubr.f32.mxu0 0.0
    %485 = vmatmul.mubr.f32.gmra.mxu0 %v330
    %v486 = vpop.f32.mrf.mxu0
    %v487 = vadd.f32 %v218, %v486
    %v488 = vpop.f32.mrf.mxu0
    %489 = vmatprep.mubr.f32.mxu0 0.0
    %490 = vmatmul.mubr.f32.gmra.mxu0 %v333
    %v491 = vpop.f32.mrf.mxu0
    %v492 = vadd.f32 %v223, %v491
    %v493 = vpop.f32.mrf.mxu0
    %494 = vmatprep.mubr.f32.mxu0 0.0
    %495 = vmatmul.mubr.f32.gmra.mxu0 %v336
    %v496 = vpop.f32.mrf.mxu0
    %v497 = vadd.f32 %v228, %v496
    %v498 = vpop.f32.mrf.mxu0
    %499 = vmatprep.mubr.f32.mxu0 0.0
    %500 = vmatmul.mubr.f32.gmra.mxu0 %v339
    %v501 = vpop.f32.mrf.mxu0
    %v502 = vadd.f32 %v233, %v501
    %v503 = vpop.f32.mrf.mxu0
    %504 = vmatprep.mubr.f32.mxu0 0.0
    %505 = vmatmul.mubr.f32.gmra.mxu0 %v342
    %v506 = vpop.f32.mrf.mxu0
    %v507 = vadd.f32 %v238, %v506
    %v508 = vpop.f32.mrf.mxu0
    %509 = vmatprep.mubr.f32.mxu0 0.0
    %510 = vmatmul.mubr.f32.gmra.mxu0 %v345
    %v511 = vpop.f32.mrf.mxu0
    %v512 = vadd.f32 %v243, %v511
    %v513 = vpop.f32.mrf.mxu0
    %514 = vmatprep.mubr.f32.mxu0 0.0
    %515 = vmatmul.mubr.f32.gmra.mxu0 %v348
    %v516 = vpop.f32.mrf.mxu0
    %v517 = vadd.f32 %v248, %v516
    %v518 = vpop.f32.mrf.mxu0
    %519 = vmatprep.mubr.f32.mxu0 0.0
    %520 = vmatmul.mubr.f32.gmra.mxu0 %v351
    %v521 = vpop.f32.mrf.mxu0
    %v522 = vadd.f32 %v253, %v521
    %v523 = vpop.f32.mrf.mxu0
    %524 = vmatprep.mubr.f32.mxu0 0.0
    %525 = vmatmul.mubr.f32.gmra.mxu0 %v354
    %v526 = vpop.f32.mrf.mxu0
    %v527 = vadd.f32 %v258, %v526
    %v528 = vpop.f32.mrf.mxu0
    %529 = vmatprep.mubr.f32.mxu0 0.0
    %530 = vmatmul.mubr.f32.gmra.mxu0 %v357
    %v531 = vpop.f32.mrf.mxu0
    %v532 = vadd.f32 %v263, %v531
    %v533 = vpop.f32.mrf.mxu0
    %534 = vmatprep.mubr.f32.mxu0 0.0
    %535 = vmatmul.mubr.f32.gmra.mxu0 %v360
    %v536 = vpop.f32.mrf.mxu0
    %v537 = vadd.f32 %v268, %v536
    %v538 = vpop.f32.mrf.mxu0
    %539 = vmatprep.mubr.f32.mxu0 0.0
    %540 = vmatmul.mubr.f32.gmra.mxu0 %v363
    %v541 = vpop.f32.mrf.mxu0
    %v542 = vadd.f32 %v273, %v541
    %v543 = vpop.f32.mrf.mxu0
    %544 = vmatprep.mubr.f32.mxu0 0.0
    %545 = vmatmul.mubr.f32.gmra.mxu0 %v366
    %v546 = vpop.f32.mrf.mxu0
    %v547 = vadd.f32 %v278, %v546
    %v548 = vpop.f32.mrf.mxu0
    %549 = vmatprep.mubr.f32.mxu0 0.0
    %550 = vmatmul.mubr.f32.gmra.mxu0 %v369
    %v551 = vpop.f32.mrf.mxu0
    %v552 = vadd.f32 %v283, %v551
    %v553 = vpop.f32.mrf.mxu0
    %554 = vmatprep.mubr.f32.mxu0 0.0
    %555 = vmatmul.mubr.f32.gmra.mxu0 %v372
    %v556 = vpop.f32.mrf.mxu0
    %v557 = vadd.f32 %v288, %v556
    %v558 = vpop.f32.mrf.mxu0
    %559 = vmatprep.mubr.f32.mxu0 0.0
    %560 = vmatmul.mubr.f32.gmra.mxu0 %v375
    %v561 = vpop.f32.mrf.mxu0
    %v562 = vadd.f32 %v293, %v561
    %v563 = vpop.f32.mrf.mxu0
    %564 = vmatprep.mubr.f32.mxu0 0.0
    %565 = vmatmul.mubr.f32.gmra.mxu0 %v378
    %v566 = vpop.f32.mrf.mxu0
    %v567 = vadd.f32 %v298, %v566
    %v568 = vpop.f32.mrf.mxu0
    %569 = vmatprep.mubr.f32.mxu0 0.0
    %570 = vmatmul.mubr.f32.gmra.mxu0 %v381
    %v571 = vpop.f32.mrf.mxu0
    %v572 = vadd.f32 %v303, %v571
    %v573 = vpop.f32.mrf.mxu0
    %574 = vmatprep.mubr.f32.mxu0 0.0
    %575 = vmatmul.mubr.f32.gmra.mxu0 %v384
    %v576 = vpop.f32.mrf.mxu0
    %v577 = vadd.f32 %v308, %v576
    %v578 = vpop.f32.mrf.mxu0
    %579 = vdwg.mxu0
    %v580 = vtanh.pop %v457
    %v581 = vtanh.pop %v462
    %v582 = vtanh.pop %v467
    %v583 = vtanh.pop %v472
    %v584 = vtanh.pop %v477
    %v585 = vtanh.pop %v482
    %v586 = vtanh.pop %v487
    %v587 = vtanh.pop %v492
    %v588 = vtanh.pop %v497
    %v589 = vtanh.pop %v502
    %v590 = vtanh.pop %v507
    %v591 = vtanh.pop %v512
    %v592 = vtanh.pop %v517
    %v593 = vtanh.pop %v522
    %v594 = vtanh.pop %v527
    %v595 = vtanh.pop %v532
    %v596 = vtanh.pop %v537
    %v597 = vtanh.pop %v542
    %v598 = vtanh.pop %v547
    %v599 = vtanh.pop %v552
    %v600 = vtanh.pop %v557
    %v601 = vtanh.pop %v562
    %v602 = vtanh.pop %v567
    %v603 = vtanh.pop %v572
    %v604 = vtanh.pop %v577
    %v605 = vld [vmem:[%s5] sm:$0xff]
    %v606 = vld [vmem:[%s5 + $0x8] sm:$0xff]
    %v607 = vld [vmem:[%s5 + $0x10] sm:$0xff]
    %v608 = vld [vmem:[%s5 + $0x18] sm:$0xff]
    %v609 = vld [vmem:[%s5 + $0x20] sm:$0xff]
    %v610 = vld [vmem:[%s5 + $0x28] sm:$0xff]
    %v611 = vld [vmem:[%s5 + $0x30] sm:$0xff]
    %v612 = vld [vmem:[%s5 + $0x38] sm:$0xff]
    %v613 = vld [vmem:[%s5 + $0x40] sm:$0xff]
    %v614 = vld [vmem:[%s5 + $0x48] sm:$0xff]
    %v615 = vld [vmem:[%s5 + $0x50] sm:$0xff]
    %v616 = vld [vmem:[%s5 + $0x58] sm:$0xff]
    %v617 = vld [vmem:[%s5 + $0x60] sm:$0xff]
    %v618 = vld [vmem:[%s5 + $0x68] sm:$0xff]
    %v619 = vld [vmem:[%s5 + $0x70] sm:$0xff]
    %v620 = vld [vmem:[%s5 + $0x78] sm:$0xff]
    %v621 = vld [vmem:[%s5 + $0x80] sm:$0xff]
    %v622 = vld [vmem:[%s5 + $0x88] sm:$0xff]
    %v623 = vld [vmem:[%s5 + $0x90] sm:$0xff]
    %v624 = vld [vmem:[%s5 + $0x98] sm:$0xff]
    %v625 = vld [vmem:[%s5 + $0xa0] sm:$0xff]
    %v626 = vld [vmem:[%s5 + $0xa8] sm:$0xff]
    %v627 = vld [vmem:[%s5 + $0xb0] sm:$0xff]
    %v628 = vld [vmem:[%s5 + $0xb8] sm:$0xff]
    %v629 = vld [vmem:[%s5 + $0xc0] sm:$0xff]
    %v630 = vld [vmem:[%s5 + $0xc8] sm:$0xff]
    %v631 = vld [vmem:[%s5 + $0xd0] sm:$0xff]
    %v632 = vld [vmem:[%s5 + $0xd8] sm:$0xff]
    %v633 = vld [vmem:[%s5 + $0xe0] sm:$0xff]
    %v634 = vld [vmem:[%s5 + $0xe8] sm:$0xff]
    %v635 = vld [vmem:[%s5 + $0xf0] sm:$0xff]
    %v636 = vld [vmem:[%s5 + $0xf8] sm:$0xff]
    %v637 = vld [vmem:[%s5 + $0x100] sm:$0xff]
    %v638 = vld [vmem:[%s5 + $0x108] sm:$0xff]
    %v639 = vld [vmem:[%s5 + $0x110] sm:$0xff]
    %v640 = vld [vmem:[%s5 + $0x118] sm:$0xff]
    %v641 = vld [vmem:[%s5 + $0x120] sm:$0xff]
    %v642 = vld [vmem:[%s5 + $0x128] sm:$0xff]
    %v643 = vld [vmem:[%s5 + $0x130] sm:$0xff]
    %v644 = vld [vmem:[%s5 + $0x138] sm:$0xff]
    %v645 = vld [vmem:[%s5 + $0x140] sm:$0xff]
    %v646 = vld [vmem:[%s5 + $0x148] sm:$0xff]
    %v647 = vld [vmem:[%s5 + $0x150] sm:$0xff]
    %v648 = vld [vmem:[%s5 + $0x158] sm:$0xff]
    %v649 = vld [vmem:[%s5 + $0x160] sm:$0xff]
    %v650 = vld [vmem:[%s5 + $0x168] sm:$0xff]
    %v651 = vld [vmem:[%s5 + $0x170] sm:$0xff]
    %v652 = vld [vmem:[%s5 + $0x178] sm:$0xff]
    %v653 = vld [vmem:[%s5 + $0x180] sm:$0xff]
    %v654 = vld [vmem:[%s5 + $0x188] sm:$0xff]
    %v655 = vld [vmem:[%s6] sm:$0xff]
    %v656 = vld [vmem:[%s6 + $0x8] sm:$0xff]
    %v657 = vld [vmem:[%s6 + $0x10] sm:$0xff]
    %v658 = vld [vmem:[%s6 + $0x18] sm:$0xff]
    %v659 = vld [vmem:[%s6 + $0x20] sm:$0xff]
    %v660 = vld [vmem:[%s6 + $0x28] sm:$0xff]
    %v661 = vld [vmem:[%s6 + $0x30] sm:$0xff]
    %v662 = vld [vmem:[%s6 + $0x38] sm:$0xff]
    %v663 = vld [vmem:[%s6 + $0x40] sm:$0xff]
    %v664 = vld [vmem:[%s6 + $0x48] sm:$0xff]
    %v665 = vld [vmem:[%s6 + $0x50] sm:$0xff]
    %v666 = vld [vmem:[%s6 + $0x58] sm:$0xff]
    %v667 = vld [vmem:[%s6 + $0x60] sm:$0xff]
    %v668 = vld [vmem:[%s6 + $0x68] sm:$0xff]
    %v669 = vld [vmem:[%s6 + $0x70] sm:$0xff]
    %v670 = vld [vmem:[%s6 + $0x78] sm:$0xff]
    %v671 = vld [vmem:[%s6 + $0x80] sm:$0xff]
    %v672 = vld [vmem:[%s6 + $0x88] sm:$0xff]
    %v673 = vld [vmem:[%s6 + $0x90] sm:$0xff]
    %v674 = vld [vmem:[%s6 + $0x98] sm:$0xff]
    %v675 = vld [vmem:[%s6 + $0xa0] sm:$0xff]
    %v676 = vld [vmem:[%s6 + $0xa8] sm:$0xff]
    %v677 = vld [vmem:[%s6 + $0xb0] sm:$0xff]
    %v678 = vld [vmem:[%s6 + $0xb8] sm:$0xff]
    %v679 = vld [vmem:[%s6 + $0xc0] sm:$0xff]
    %681 = vset.pattern.permute.xlu0 0
    %682 = vperm.xlu0 %681, %v655
    %v683 = vpop.permute.xlu0 %682
    %686 = vset.pattern.permute.xlu0 0
    %687 = vperm.xlu0 %686, %v656
    %v688 = vpop.permute.xlu0 %687
    %691 = vset.pattern.permute.xlu0 0
    %692 = vperm.xlu0 %691, %v657
    %v693 = vpop.permute.xlu0 %692
    %696 = vset.pattern.permute.xlu0 0
    %697 = vperm.xlu0 %696, %v658
    %v698 = vpop.permute.xlu0 %697
    %701 = vset.pattern.permute.xlu0 0
    %702 = vperm.xlu0 %701, %v659
    %v703 = vpop.permute.xlu0 %702
    %706 = vset.pattern.permute.xlu0 0
    %707 = vperm.xlu0 %706, %v660
    %v708 = vpop.permute.xlu0 %707
    %711 = vset.pattern.permute.xlu0 0
    %712 = vperm.xlu0 %711, %v661
    %v713 = vpop.permute.xlu0 %712
    %716 = vset.pattern.permute.xlu0 0
    %717 = vperm.xlu0 %716, %v662
    %v718 = vpop.permute.xlu0 %717
    %721 = vset.pattern.permute.xlu0 0
    %722 = vperm.xlu0 %721, %v663
    %v723 = vpop.permute.xlu0 %722
    %726 = vset.pattern.permute.xlu0 0
    %727 = vperm.xlu0 %726, %v664
    %v728 = vpop.permute.xlu0 %727
    %731 = vset.pattern.permute.xlu0 0
    %732 = vperm.xlu0 %731, %v665
    %v733 = vpop.permute.xlu0 %732
    %736 = vset.pattern.permute.xlu0 0
    %737 = vperm.xlu0 %736, %v666
    %v738 = vpop.permute.xlu0 %737
    %741 = vset.pattern.permute.xlu0 0
    %742 = vperm.xlu0 %741, %v667
    %v743 = vpop.permute.xlu0 %742
    %746 = vset.pattern.permute.xlu0 0
    %747 = vperm.xlu0 %746, %v668
    %v748 = vpop.permute.xlu0 %747
    %751 = vset.pattern.permute.xlu0 0
    %752 = vperm.xlu0 %751, %v669
    %v753 = vpop.permute.xlu0 %752
    %756 = vset.pattern.permute.xlu0 0
    %757 = vperm.xlu0 %756, %v670
    %v758 = vpop.permute.xlu0 %757
    %761 = vset.pattern.permute.xlu0 0
    %762 = vperm.xlu0 %761, %v671
    %v763 = vpop.permute.xlu0 %762
    %766 = vset.pattern.permute.xlu0 0
    %767 = vperm.xlu0 %766, %v672
    %v768 = vpop.permute.xlu0 %767
    %771 = vset.pattern.permute.xlu0 0
    %772 = vperm.xlu0 %771, %v673
    %v773 = vpop.permute.xlu0 %772
    %776 = vset.pattern.permute.xlu0 0
    %777 = vperm.xlu0 %776, %v674
    %v778 = vpop.permute.xlu0 %777
    %781 = vset.pattern.permute.xlu0 0
    %782 = vperm.xlu0 %781, %v675
    %v783 = vpop.permute.xlu0 %782
    %786 = vset.pattern.permute.xlu0 0
    %787 = vperm.xlu0 %786, %v676
    %v788 = vpop.permute.xlu0 %787
    %791 = vset.pattern.permute.xlu0 0
    %792 = vperm.xlu0 %791, %v677
    %v793 = vpop.permute.xlu0 %792
    %796 = vset.pattern.permute.xlu0 0
    %797 = vperm.xlu0 %796, %v678
    %v798 = vpop.permute.xlu0 %797
    %801 = vset.pattern.permute.xlu0 0
    %802 = vperm.xlu0 %801, %v679
    %v803 = vpop.permute.xlu0 %802
    %vm805 = vcmask 588800
    %v807 = vsel %vm805, %v606, 0
    %v810 = vsel %vm805, %v608, 0
    %v813 = vsel %vm805, %v610, 0
    %v816 = vsel %vm805, %v612, 0
    %v819 = vsel %vm805, %v614, 0
    %v822 = vsel %vm805, %v616, 0
    %v825 = vsel %vm805, %v618, 0
    %v828 = vsel %vm805, %v620, 0
    %v831 = vsel %vm805, %v622, 0
    %v834 = vsel %vm805, %v624, 0
    %v837 = vsel %vm805, %v626, 0
    %v840 = vsel %vm805, %v628, 0
    %v843 = vsel %vm805, %v630, 0
    %v846 = vsel %vm805, %v632, 0
    %v849 = vsel %vm805, %v634, 0
    %v852 = vsel %vm805, %v636, 0
    %v855 = vsel %vm805, %v638, 0
    %v858 = vsel %vm805, %v640, 0
    %v861 = vsel %vm805, %v642, 0
    %v864 = vsel %vm805, %v644, 0
    %v867 = vsel %vm805, %v646, 0
    %v870 = vsel %vm805, %v648, 0
    %v873 = vsel %vm805, %v650, 0
    %v876 = vsel %vm805, %v652, 0
    %v879 = vsel %vm805, %v654, 0
    %881 = vmatprep.subr.mxu0 0.0
    %882 = vmatpush1.msra.mxu0 %v595
    %883 = vmatprep.subr.mxu0 0.0
    %884 = vmatpush1.msra.mxu0 %v594
    %885 = vmatprep.subr.mxu0 0.0
    %886 = vmatpush1.msra.mxu0 %v593
    %887 = vmatprep.subr.mxu0 0.0
    %888 = vmatpush1.msra.mxu0 %v592
    %889 = vmatprep.subr.mxu0 0.0
    %890 = vmatpush1.msra.mxu0 %v591
    %891 = vmatprep.subr.mxu0 0.0
    %892 = vmatpush1.msra.mxu0 %v590
    %893 = vmatprep.subr.mxu0 0.0
    %894 = vmatpush1.msra.mxu0 %v589
    %895 = vmatprep.subr.mxu0 0.0
    %896 = vmatpush1.msra.mxu0 %v588
    %897 = vmatprep.subr.mxu0 0.0
    %898 = vmatpush1.msra.mxu0 %v587
    %899 = vmatprep.subr.mxu0 0.0
    %900 = vmatpush1.msra.mxu0 %v586
    %901 = vmatprep.subr.mxu0 0.0
    %902 = vmatpush1.msra.mxu0 %v585
    %903 = vmatprep.subr.mxu0 0.0
    %904 = vmatpush1.msra.mxu0 %v584
    %905 = vmatprep.subr.mxu0 0.0
    %906 = vmatpush1.msra.mxu0 %v583
    %907 = vmatprep.subr.mxu0 0.0
    %908 = vmatpush1.msra.mxu0 %v582
    %909 = vmatprep.subr.mxu0 0.0
    %910 = vmatpush1.msra.mxu0 %v581
    %911 = vmatprep.subr.mxu0 0.0
    %912 = vmatpush1.msra.mxu0 %v580
    %913 = vmatprep.subr.mxu0 0.0
    %914 = vmatpush2.msra.mxu0 0.0
    %915 = vmatprep.subr.mxu0 0.0
    %916 = vmatpush2.msra.mxu0 0.0
    %917 = vmatprep.subr.mxu0 0.0
    %918 = vmatpush2.msra.mxu0 0.0
    %919 = vmatprep.subr.mxu0 0.0
    %920 = vmatpush2.msra.mxu0 0.0
    %921 = vmatprep.subr.mxu0 0.0
    %922 = vmatpush2.msra.mxu0 0.0
    %923 = vmatprep.subr.mxu0 0.0
    %924 = vmatpush2.msra.mxu0 0.0
    %925 = vmatprep.subr.mxu0 0.0
    %926 = vmatpush2.msra.mxu0 0.0
    %927 = vmatprep.subr.mxu0 0.0
    %928 = vmatpush2.msra.mxu0 %v604
    %929 = vmatprep.subr.mxu0 0.0
    %930 = vmatpush2.msra.mxu0 %v603
    %931 = vmatprep.subr.mxu0 0.0
    %932 = vmatpush2.msra.mxu0 %v602
    %933 = vmatprep.subr.mxu0 0.0
    %934 = vmatpush2.msra.mxu0 %v601
    %935 = vmatprep.subr.mxu0 0.0
    %936 = vmatpush2.msra.mxu0 %v600
    %937 = vmatprep.subr.mxu0 0.0
    %938 = vmatpush2.msra.mxu0 %v599
    %939 = vmatprep.subr.mxu0 0.0
    %940 = vmatpush2.msra.mxu0 %v598
    %941 = vmatprep.subr.mxu0 0.0
    %942 = vmatpush2.msra.mxu0 %v597
    %943 = vmatprep.subr.mxu0 0.0
    %944 = vmatpush2.msra.mxu0 %v596
    %945 = vmatprep.mubr.f32.mxu0 %v807
    %946 = vmatmul.mubr.f32.gmra.mxu0 %v605
    %v947 = vpop.f32.mrf.mxu0
    %v948 = vadd.f32 %v683, %v947
    %v949 = vpop.f32.mrf.mxu0
    %950 = vmatprep.mubr.f32.mxu0 %v810
    %951 = vmatmul.mubr.f32.gmra.mxu0 %v607
    %v952 = vpop.f32.mrf.mxu0
    %v953 = vadd.f32 %v688, %v952
    %v954 = vpop.f32.mrf.mxu0
    %955 = vmatprep.mubr.f32.mxu0 %v813
    %956 = vmatmul.mubr.f32.gmra.mxu0 %v609
    %v957 = vpop.f32.mrf.mxu0
    %v958 = vadd.f32 %v693, %v957
    %v959 = vpop.f32.mrf.mxu0
    %960 = vmatprep.mubr.f32.mxu0 %v816
    %961 = vmatmul.mubr.f32.gmra.mxu0 %v611
    %v962 = vpop.f32.mrf.mxu0
    %v963 = vadd.f32 %v698, %v962
    %v964 = vpop.f32.mrf.mxu0
    %965 = vmatprep.mubr.f32.mxu0 %v819
    %966 = vmatmul.mubr.f32.gmra.mxu0 %v613
    %v967 = vpop.f32.mrf.mxu0
    %v968 = vadd.f32 %v703, %v967
    %v969 = vpop.f32.mrf.mxu0
    %970 = vmatprep.mubr.f32.mxu0 %v822
    %971 = vmatmul.mubr.f32.gmra.mxu0 %v615
    %v972 = vpop.f32.mrf.mxu0
    %v973 = vadd.f32 %v708, %v972
    %v974 = vpop.f32.mrf.mxu0
    %975 = vmatprep.mubr.f32.mxu0 %v825
    %976 = vmatmul.mubr.f32.gmra.mxu0 %v617
    %v977 = vpop.f32.mrf.mxu0
    %v978 = vadd.f32 %v713, %v977
    %v979 = vpop.f32.mrf.mxu0
    %980 = vmatprep.mubr.f32.mxu0 %v828
    %981 = vmatmul.mubr.f32.gmra.mxu0 %v619
    %v982 = vpop.f32.mrf.mxu0
    %v983 = vadd.f32 %v718, %v982
    %v984 = vpop.f32.mrf.mxu0
    %985 = vmatprep.mubr.f32.mxu0 %v831
    %986 = vmatmul.mubr.f32.gmra.mxu0 %v621
    %v987 = vpop.f32.mrf.mxu0
    %v988 = vadd.f32 %v723, %v987
    %v989 = vpop.f32.mrf.mxu0
    %990 = vmatprep.mubr.f32.mxu0 %v834
    %991 = vmatmul.mubr.f32.gmra.mxu0 %v623
    %v992 = vpop.f32.mrf.mxu0
    %v993 = vadd.f32 %v728, %v992
    %v994 = vpop.f32.mrf.mxu0
    %995 = vmatprep.mubr.f32.mxu0 %v837
    %996 = vmatmul.mubr.f32.gmra.mxu0 %v625
    %v997 = vpop.f32.mrf.mxu0
    %v998 = vadd.f32 %v733, %v997
    %v999 = vpop.f32.mrf.mxu0
    %1000 = vmatprep.mubr.f32.mxu0 %v840
    %1001 = vmatmul.mubr.f32.gmra.mxu0 %v627
    %v1002 = vpop.f32.mrf.mxu0
    %v1003 = vadd.f32 %v738, %v1002
    %v1004 = vpop.f32.mrf.mxu0
    %1005 = vmatprep.mubr.f32.mxu0 %v843
    %1006 = vmatmul.mubr.f32.gmra.mxu0 %v629
    %v1007 = vpop.f32.mrf.mxu0
    %v1008 = vadd.f32 %v743, %v1007
    %v1009 = vpop.f32.mrf.mxu0
    %1010 = vmatprep.mubr.f32.mxu0 %v846
    %1011 = vmatmul.mubr.f32.gmra.mxu0 %v631
    %v1012 = vpop.f32.mrf.mxu0
    %v1013 = vadd.f32 %v748, %v1012
    %v1014 = vpop.f32.mrf.mxu0
    %1015 = vmatprep.mubr.f32.mxu0 %v849
    %1016 = vmatmul.mubr.f32.gmra.mxu0 %v633
    %v1017 = vpop.f32.mrf.mxu0
    %v1018 = vadd.f32 %v753, %v1017
    %v1019 = vpop.f32.mrf.mxu0
    %1020 = vmatprep.mubr.f32.mxu0 %v852
    %1021 = vmatmul.mubr.f32.gmra.mxu0 %v635
    %v1022 = vpop.f32.mrf.mxu0
    %v1023 = vadd.f32 %v758, %v1022
    %v1024 = vpop.f32.mrf.mxu0
    %1025 = vmatprep.mubr.f32.mxu0 %v855
    %1026 = vmatmul.mubr.f32.gmra.mxu0 %v637
    %v1027 = vpop.f32.mrf.mxu0
    %v1028 = vadd.f32 %v763, %v1027
    %v1029 = vpop.f32.mrf.mxu0
    %1030 = vmatprep.mubr.f32.mxu0 %v858
    %1031 = vmatmul.mubr.f32.gmra.mxu0 %v639
    %v1032 = vpop.f32.mrf.mxu0
    %v1033 = vadd.f32 %v768, %v1032
    %v1034 = vpop.f32.mrf.mxu0
    %1035 = vmatprep.mubr.f32.mxu0 %v861
    %1036 = vmatmul.mubr.f32.gmra.mxu0 %v641
    %v1037 = vpop.f32.mrf.mxu0
    %v1038 = vadd.f32 %v773, %v1037
    %v1039 = vpop.f32.mrf.mxu0
    %1040 = vmatprep.mubr.f32.mxu0 %v864
    %1041 = vmatmul.mubr.f32.gmra.mxu0 %v643
    %v1042 = vpop.f32.mrf.mxu0
    %v1043 = vadd.f32 %v778, %v1042
    %v1044 = vpop.f32.mrf.mxu0
    %1045 = vmatprep.mubr.f32.mxu0 %v867
    %1046 = vmatmul.mubr.f32.gmra.mxu0 %v645
    %v1047 = vpop.f32.mrf.mxu0
    %v1048 = vadd.f32 %v783, %v1047
    %v1049 = vpop.f32.mrf.mxu0
    %1050 = vmatprep.mubr.f32.mxu0 %v870
    %1051 = vmatmul.mubr.f32.gmra.mxu0 %v647
    %v1052 = vpop.f32.mrf.mxu0
    %v1053 = vadd.f32 %v788, %v1052
    %v1054 = vpop.f32.mrf.mxu0
    %1055 = vmatprep.mubr.f32.mxu0 %v873
    %1056 = vmatmul.mubr.f32.gmra.mxu0 %v649
    %v1057 = vpop.f32.mrf.mxu0
    %v1058 = vadd.f32 %v793, %v1057
    %v1059 = vpop.f32.mrf.mxu0
    %1060 = vmatprep.mubr.f32.mxu0 %v876
    %1061 = vmatmul.mubr.f32.gmra.mxu0 %v651
    %v1062 = vpop.f32.mrf.mxu0
    %v1063 = vadd.f32 %v798, %v1062
    %v1064 = vpop.f32.mrf.mxu0
    %1065 = vmatprep.mubr.f32.mxu0 %v879
    %1066 = vmatmul.mubr.f32.gmra.mxu0 %v653
    %v1067 = vpop.f32.mrf.mxu0
    %v1068 = vadd.f32 %v803, %v1067
    %v1069 = vpop.f32.mrf.mxu0
    %1070 = vdwg.mxu0
    %v1071 = vtanh.pop %v948
    %v1072 = vtanh.pop %v953
    %v1073 = vtanh.pop %v958
    %v1074 = vtanh.pop %v963
    %v1075 = vtanh.pop %v968
    %v1076 = vtanh.pop %v973
    %v1077 = vtanh.pop %v978
    %v1078 = vtanh.pop %v983
    %v1079 = vtanh.pop %v988
    %v1080 = vtanh.pop %v993
    %v1081 = vtanh.pop %v998
    %v1082 = vtanh.pop %v1003
    %v1083 = vtanh.pop %v1008
    %v1084 = vtanh.pop %v1013
    %v1085 = vtanh.pop %v1018
    %v1086 = vtanh.pop %v1023
    %v1087 = vtanh.pop %v1028
    %v1088 = vtanh.pop %v1033
    %v1089 = vtanh.pop %v1038
    %v1090 = vtanh.pop %v1043
    %v1091 = vtanh.pop %v1048
    %v1092 = vtanh.pop %v1053
    %v1093 = vtanh.pop %v1058
    %v1094 = vtanh.pop %v1063
    %v1095 = vtanh.pop %v1068
    %v1096 = vld [vmem:[%s7] sm:$0xff]
    %v1097 = vld [vmem:[%s7 + $0x8] sm:$0xff]
    %v1098 = vld [vmem:[%s7 + $0x10] sm:$0xff]
    %v1099 = vld [vmem:[%s7 + $0x18] sm:$0xff]
    %v1100 = vld [vmem:[%s7 + $0x20] sm:$0xff]
    %v1101 = vld [vmem:[%s7 + $0x28] sm:$0xff]
    %v1102 = vld [vmem:[%s7 + $0x30] sm:$0xff]
    %v1103 = vld [vmem:[%s7 + $0x38] sm:$0xff]
    %v1104 = vld [vmem:[%s7 + $0x40] sm:$0xff]
    %v1105 = vld [vmem:[%s7 + $0x48] sm:$0xff]
    %v1106 = vld [vmem:[%s7 + $0x50] sm:$0xff]
    %v1107 = vld [vmem:[%s7 + $0x58] sm:$0xff]
    %v1108 = vld [vmem:[%s7 + $0x60] sm:$0xff]
    %v1109 = vld [vmem:[%s7 + $0x68] sm:$0xff]
    %v1110 = vld [vmem:[%s7 + $0x70] sm:$0xff]
    %v1111 = vld [vmem:[%s7 + $0x78] sm:$0xff]
    %v1112 = vld [vmem:[%s7 + $0x80] sm:$0xff]
    %v1113 = vld [vmem:[%s7 + $0x88] sm:$0xff]
    %v1114 = vld [vmem:[%s7 + $0x90] sm:$0xff]
    %v1115 = vld [vmem:[%s7 + $0x98] sm:$0xff]
    %v1116 = vld [vmem:[%s7 + $0xa0] sm:$0xff]
    %v1117 = vld [vmem:[%s7 + $0xa8] sm:$0xff]
    %v1118 = vld [vmem:[%s7 + $0xb0] sm:$0xff]
    %v1119 = vld [vmem:[%s7 + $0xb8] sm:$0xff]
    %v1120 = vld [vmem:[%s7 + $0xc0] sm:$0xf]
    %v1121 = vld [vmem:[%s7 + $0xc8] sm:$0xf]
    %v1122 = vld [vmem:[%s8] sm:$0xff]
    %v1123 = vld [vmem:[%s8 + $0x8] sm:$0xff]
    %v1124 = vld [vmem:[%s8 + $0x10] sm:$0xff]
    %v1125 = vld [vmem:[%s8 + $0x18] sm:$0xff]
    %v1126 = vld [vmem:[%s8 + $0x20] sm:$0xff]
    %v1127 = vld [vmem:[%s8 + $0x28] sm:$0xff]
    %v1128 = vld [vmem:[%s8 + $0x30] sm:$0xff]
    %v1129 = vld [vmem:[%s8 + $0x38] sm:$0xff]
    %v1130 = vld [vmem:[%s8 + $0x40] sm:$0xff]
    %v1131 = vld [vmem:[%s8 + $0x48] sm:$0xff]
    %v1132 = vld [vmem:[%s8 + $0x50] sm:$0xff]
    %v1133 = vld [vmem:[%s8 + $0x58] sm:$0xff]
    %v1134 = vld [vmem:[%s8 + $0x60] sm:$0xf]
    %1136 = vset.pattern.permute.xlu0 0
    %1137 = vperm.xlu0 %1136, %v1122
    %v1138 = vpop.permute.xlu0 %1137
    %1141 = vset.pattern.permute.xlu0 0
    %1142 = vperm.xlu0 %1141, %v1123
    %v1143 = vpop.permute.xlu0 %1142
    %1146 = vset.pattern.permute.xlu0 0
    %1147 = vperm.xlu0 %1146, %v1124
    %v1148 = vpop.permute.xlu0 %1147
    %1151 = vset.pattern.permute.xlu0 0
    %1152 = vperm.xlu0 %1151, %v1125
    %v1153 = vpop.permute.xlu0 %1152
    %1156 = vset.pattern.permute.xlu0 0
    %1157 = vperm.xlu0 %1156, %v1126
    %v1158 = vpop.permute.xlu0 %1157
    %1161 = vset.pattern.permute.xlu0 0
    %1162 = vperm.xlu0 %1161, %v1127
    %v1163 = vpop.permute.xlu0 %1162
    %1166 = vset.pattern.permute.xlu0 0
    %1167 = vperm.xlu0 %1166, %v1128
    %v1168 = vpop.permute.xlu0 %1167
    %1171 = vset.pattern.permute.xlu0 0
    %1172 = vperm.xlu0 %1171, %v1129
    %v1173 = vpop.permute.xlu0 %1172
    %1176 = vset.pattern.permute.xlu0 0
    %1177 = vperm.xlu0 %1176, %v1130
    %v1178 = vpop.permute.xlu0 %1177
    %1181 = vset.pattern.permute.xlu0 0
    %1182 = vperm.xlu0 %1181, %v1131
    %v1183 = vpop.permute.xlu0 %1182
    %1186 = vset.pattern.permute.xlu0 0
    %1187 = vperm.xlu0 %1186, %v1132
    %v1188 = vpop.permute.xlu0 %1187
    %1191 = vset.pattern.permute.xlu0 0
    %1192 = vperm.xlu0 %1191, %v1133
    %v1193 = vpop.permute.xlu0 %1192
    %1196 = vset.pattern.permute.xlu0 0
    %1197 = vperm.xlu0 %1196, %v1134
    %v1198 = vpop.permute.xlu0 %1197
    %v1201 = vsel %vm805, %v1097, 0
    %v1204 = vsel %vm805, %v1099, 0
    %v1207 = vsel %vm805, %v1101, 0
    %v1210 = vsel %vm805, %v1103, 0
    %v1213 = vsel %vm805, %v1105, 0
    %v1216 = vsel %vm805, %v1107, 0
    %v1219 = vsel %vm805, %v1109, 0
    %v1222 = vsel %vm805, %v1111, 0
    %v1225 = vsel %vm805, %v1113, 0
    %v1228 = vsel %vm805, %v1115, 0
    %v1231 = vsel %vm805, %v1117, 0
    %v1234 = vsel %vm805, %v1119, 0
    %v1237 = vsel %vm805, %v1121, 0
    %1239 = vmatprep.subr.mxu0 0.0
    %1240 = vmatpush1.msra.mxu0 %v1086
    %1241 = vmatprep.subr.mxu0 0.0
    %1242 = vmatpush1.msra.mxu0 %v1085
    %1243 = vmatprep.subr.mxu0 0.0
    %1244 = vmatpush1.msra.mxu0 %v1084
    %1245 = vmatprep.subr.mxu0 0.0
    %1246 = vmatpush1.msra.mxu0 %v1083
    %1247 = vmatprep.subr.mxu0 0.0
    %1248 = vmatpush1.msra.mxu0 %v1082
    %1249 = vmatprep.subr.mxu0 0.0
    %1250 = vmatpush1.msra.mxu0 %v1081
    %1251 = vmatprep.subr.mxu0 0.0
    %1252 = vmatpush1.msra.mxu0 %v1080
    %1253 = vmatprep.subr.mxu0 0.0
    %1254 = vmatpush1.msra.mxu0 %v1079
    %1255 = vmatprep.subr.mxu0 0.0
    %1256 = vmatpush1.msra.mxu0 %v1078
    %1257 = vmatprep.subr.mxu0 0.0
    %1258 = vmatpush1.msra.mxu0 %v1077
    %1259 = vmatprep.subr.mxu0 0.0
    %1260 = vmatpush1.msra.mxu0 %v1076
    %1261 = vmatprep.subr.mxu0 0.0
    %1262 = vmatpush1.msra.mxu0 %v1075
    %1263 = vmatprep.subr.mxu0 0.0
    %1264 = vmatpush1.msra.mxu0 %v1074
    %1265 = vmatprep.subr.mxu0 0.0
    %1266 = vmatpush1.msra.mxu0 %v1073
    %1267 = vmatprep.subr.mxu0 0.0
    %1268 = vmatpush1.msra.mxu0 %v1072
    %1269 = vmatprep.subr.mxu0 0.0
    %1270 = vmatpush1.msra.mxu0 %v1071
    %1271 = vmatprep.subr.mxu0 0.0
    %1272 = vmatpush2.msra.mxu0 0.0
    %1273 = vmatprep.subr.mxu0 0.0
    %1274 = vmatpush2.msra.mxu0 0.0
    %1275 = vmatprep.subr.mxu0 0.0
    %1276 = vmatpush2.msra.mxu0 0.0
    %1277 = vmatprep.subr.mxu0 0.0
    %1278 = vmatpush2.msra.mxu0 0.0
    %1279 = vmatprep.subr.mxu0 0.0
    %1280 = vmatpush2.msra.mxu0 0.0
    %1281 = vmatprep.subr.mxu0 0.0
    %1282 = vmatpush2.msra.mxu0 0.0
    %1283 = vmatprep.subr.mxu0 0.0
    %1284 = vmatpush2.msra.mxu0 0.0
    %1285 = vmatprep.subr.mxu0 0.0
    %1286 = vmatpush2.msra.mxu0 %v1095
    %1287 = vmatprep.subr.mxu0 0.0
    %1288 = vmatpush2.msra.mxu0 %v1094
    %1289 = vmatprep.subr.mxu0 0.0
    %1290 = vmatpush2.msra.mxu0 %v1093
    %1291 = vmatprep.subr.mxu0 0.0
    %1292 = vmatpush2.msra.mxu0 %v1092
    %1293 = vmatprep.subr.mxu0 0.0
    %1294 = vmatpush2.msra.mxu0 %v1091
    %1295 = vmatprep.subr.mxu0 0.0
    %1296 = vmatpush2.msra.mxu0 %v1090
    %1297 = vmatprep.subr.mxu0 0.0
    %1298 = vmatpush2.msra.mxu0 %v1089
    %1299 = vmatprep.subr.mxu0 0.0
    %1300 = vmatpush2.msra.mxu0 %v1088
    %1301 = vmatprep.subr.mxu0 0.0
    %1302 = vmatpush2.msra.mxu0 %v1087
    %1303 = vmatprep.mubr.f32.mxu0 %v1201
    %1304 = vmatmul.mubr.f32.gmra.mxu0 %v1096
    %v1305 = vpop.f32.mrf.mxu0
    %v1306 = vadd.f32 %v1138, %v1305
    %v1307 = vpop.f32.mrf.mxu0
    %1308 = vmatprep.mubr.f32.mxu0 %v1204
    %1309 = vmatmul.mubr.f32.gmra.mxu0 %v1098
    %v1310 = vpop.f32.mrf.mxu0
    %v1311 = vadd.f32 %v1143, %v1310
    %v1312 = vpop.f32.mrf.mxu0
    %1313 = vmatprep.mubr.f32.mxu0 %v1207
    %1314 = vmatmul.mubr.f32.gmra.mxu0 %v1100
    %v1315 = vpop.f32.mrf.mxu0
    %v1316 = vadd.f32 %v1148, %v1315
    %v1317 = vpop.f32.mrf.mxu0
    %1318 = vmatprep.mubr.f32.mxu0 %v1210
    %1319 = vmatmul.mubr.f32.gmra.mxu0 %v1102
    %v1320 = vpop.f32.mrf.mxu0
    %v1321 = vadd.f32 %v1153, %v1320
    %v1322 = vpop.f32.mrf.mxu0
    %1323 = vmatprep.mubr.f32.mxu0 %v1213
    %1324 = vmatmul.mubr.f32.gmra.mxu0 %v1104
    %v1325 = vpop.f32.mrf.mxu0
    %v1326 = vadd.f32 %v1158, %v1325
    %v1327 = vpop.f32.mrf.mxu0
    %1328 = vmatprep.mubr.f32.mxu0 %v1216
    %1329 = vmatmul.mubr.f32.gmra.mxu0 %v1106
    %v1330 = vpop.f32.mrf.mxu0
    %v1331 = vadd.f32 %v1163, %v1330
    %v1332 = vpop.f32.mrf.mxu0
    %1333 = vmatprep.mubr.f32.mxu0 %v1219
    %1334 = vmatmul.mubr.f32.gmra.mxu0 %v1108
    %v1335 = vpop.f32.mrf.mxu0
    %v1336 = vadd.f32 %v1168, %v1335
    %v1337 = vpop.f32.mrf.mxu0
    %1338 = vmatprep.mubr.f32.mxu0 %v1222
    %1339 = vmatmul.mubr.f32.gmra.mxu0 %v1110
    %v1340 = vpop.f32.mrf.mxu0
    %v1341 = vadd.f32 %v1173, %v1340
    %v1342 = vpop.f32.mrf.mxu0
    %1343 = vmatprep.mubr.f32.mxu0 %v1225
    %1344 = vmatmul.mubr.f32.gmra.mxu0 %v1112
    %v1345 = vpop.f32.mrf.mxu0
    %v1346 = vadd.f32 %v1178, %v1345
    %v1347 = vpop.f32.mrf.mxu0
    %1348 = vmatprep.mubr.f32.mxu0 %v1228
    %1349 = vmatmul.mubr.f32.gmra.mxu0 %v1114
    %v1350 = vpop.f32.mrf.mxu0
    %v1351 = vadd.f32 %v1183, %v1350
    %v1352 = vpop.f32.mrf.mxu0
    %1353 = vmatprep.mubr.f32.mxu0 %v1231
    %1354 = vmatmul.mubr.f32.gmra.mxu0 %v1116
    %v1355 = vpop.f32.mrf.mxu0
    %v1356 = vadd.f32 %v1188, %v1355
    %v1357 = vpop.f32.mrf.mxu0
    %1358 = vmatprep.mubr.f32.mxu0 %v1234
    %1359 = vmatmul.mubr.f32.gmra.mxu0 %v1118
    %v1360 = vpop.f32.mrf.mxu0
    %v1361 = vadd.f32 %v1193, %v1360
    %v1362 = vpop.f32.mrf.mxu0
    %1363 = vmatprep.mubr.f32.mxu0 %v1237
    %1364 = vmatmul.mubr.f32.gmra.mxu0 %v1120
    %v1365 = vpop.f32.mrf.mxu0
    %v1366 = vadd.f32 %v1198, %v1365
    %v1367 = vpop.f32.mrf.mxu0
    %1368 = vdwg.mxu0
    %v1369 = vmax.f32 %v1306, 0.0
    %v1370 = vmax.f32 %v1311, 0.0
    %v1371 = vmax.f32 %v1316, 0.0
    %v1372 = vmax.f32 %v1321, 0.0
    %v1373 = vmax.f32 %v1326, 0.0
    %v1374 = vmax.f32 %v1331, 0.0
    %v1375 = vmax.f32 %v1336, 0.0
    %v1376 = vmax.f32 %v1341, 0.0
    %v1377 = vmax.f32 %v1346, 0.0
    %v1378 = vmax.f32 %v1351, 0.0
    %v1379 = vmax.f32 %v1356, 0.0
    %v1380 = vmax.f32 %v1361, 0.0
    %v1381 = vmax.f32 %v1366, 0.0
    %v1382 = vld [vmem:[%s9] sm:$0x1]
    %v1383 = vld [vmem:[#allocation2] sm:$0x1]
    %1385 = vset.pattern.permute.xlu0 0
    %1386 = vperm.xlu0 %1385, %v1383
    %v1387 = vpop.permute.xlu0 %1386
    %v1389 = vlaneseq
    %v1390 = vshrl.u32 %v1389, 7
    %v1391 = vsub.s32 0, %v1390
    %v1392 = vrot.slane %v1387, %v1391
    %vm1393 = vcmask 818176
    %v1395 = vsel %vm1393, %v1382, 0
    %v1398 = vsel %vm386, %v1381, 0
    %1400 = vmatprep.subr.mxu0 0.0
    %1401 = vmatpush1.msra.mxu0 0.0
    %1402 = vmatprep.subr.mxu0 0.0
    %1403 = vmatpush1.msra.mxu0 0.0
    %1404 = vmatprep.subr.mxu0 0.0
    %1405 = vmatpush1.msra.mxu0 0.0
    %1406 = vmatprep.subr.mxu0 0.0
    %1407 = vmatpush1.msra.mxu0 %v1398
    %1408 = vmatprep.subr.mxu0 0.0
    %1409 = vmatpush1.msra.mxu0 %v1380
    %1410 = vmatprep.subr.mxu0 0.0
    %1411 = vmatpush1.msra.mxu0 %v1379
    %1412 = vmatprep.subr.mxu0 0.0
    %1413 = vmatpush1.msra.mxu0 %v1378
    %1414 = vmatprep.subr.mxu0 0.0
    %1415 = vmatpush1.msra.mxu0 %v1377
    %1416 = vmatprep.subr.mxu0 0.0
    %1417 = vmatpush1.msra.mxu0 %v1376
    %1418 = vmatprep.subr.mxu0 0.0
    %1419 = vmatpush1.msra.mxu0 %v1375
    %1420 = vmatprep.subr.mxu0 0.0
    %1421 = vmatpush1.msra.mxu0 %v1374
    %1422 = vmatprep.subr.mxu0 0.0
    %1423 = vmatpush1.msra.mxu0 %v1373
    %1424 = vmatprep.subr.mxu0 0.0
    %1425 = vmatpush1.msra.mxu0 %v1372
    %1426 = vmatprep.subr.mxu0 0.0
    %1427 = vmatpush1.msra.mxu0 %v1371
    %1428 = vmatprep.subr.mxu0 0.0
    %1429 = vmatpush1.msra.mxu0 %v1370
    %1430 = vmatprep.subr.mxu0 0.0
    %1431 = vmatpush1.msra.mxu0 %v1369
    %1432 = vmatprep.subr.mxu0 0.0
    %1433 = vmatpush2.msra.mxu0 0.0
    %1434 = vmatprep.subr.mxu0 0.0
    %1435 = vmatpush2.msra.mxu0 0.0
    %1436 = vmatprep.subr.mxu0 0.0
    %1437 = vmatpush2.msra.mxu0 0.0
    %1438 = vmatprep.subr.mxu0 0.0
    %1439 = vmatpush2.msra.mxu0 0.0
    %1440 = vmatprep.subr.mxu0 0.0
    %1441 = vmatpush2.msra.mxu0 0.0
    %1442 = vmatprep.subr.mxu0 0.0
    %1443 = vmatpush2.msra.mxu0 0.0
    %1444 = vmatprep.subr.mxu0 0.0
    %1445 = vmatpush2.msra.mxu0 0.0
    %1446 = vmatprep.subr.mxu0 0.0
    %1447 = vmatpush2.msra.mxu0 0.0
    %1448 = vmatprep.subr.mxu0 0.0
    %1449 = vmatpush2.msra.mxu0 0.0
    %1450 = vmatprep.subr.mxu0 0.0
    %1451 = vmatpush2.msra.mxu0 0.0
    %1452 = vmatprep.subr.mxu0 0.0
    %1453 = vmatpush2.msra.mxu0 0.0
    %1454 = vmatprep.subr.mxu0 0.0
    %1455 = vmatpush2.msra.mxu0 0.0
    %1456 = vmatprep.subr.mxu0 0.0
    %1457 = vmatpush2.msra.mxu0 0.0
    %1458 = vmatprep.subr.mxu0 0.0
    %1459 = vmatpush2.msra.mxu0 0.0
    %1460 = vmatprep.subr.mxu0 0.0
    %1461 = vmatpush2.msra.mxu0 0.0
    %1462 = vmatprep.subr.mxu0 0.0
    %1463 = vmatpush2.msra.mxu0 0.0
    %1464 = vmatprep.mubr.f32.mxu0 0.0
    %1465 = vmatmul.mubr.f32.gmra.mxu0 %v1395
    %v1466 = vpop.f32.mrf.mxu0
    %v1467 = vadd.f32 %v1392, %v1466
    %v1468 = vpop.f32.mrf.mxu0
    %1469 = vdwg.mxu0
    %1470 = vst [vmem:[#allocation3] sm:$0x1] %v1467
    // Predicated region
    $region46: #{tpu_custom_call.1} parent=1 // pred_check
      _
    $region47: #{tpu_custom_call.1} parent=1 // pred_check_branch
      %1472 = sbr.rel (0) target = $region49
    $region48: #{tpu_custom_call.1} parent=1 // pred_region
      %s1474 = ssub.s32 16, 16
      %1475 = vsyncadd [#allocation4], %s1474
      %s1477 = sshll.u32 [#allocation3], 4
      %s1478 = int_to_ptr.vmem [resolvable:$true] %s1477
      %1480 = dma.vmem_to_hbm [thread:$0]  %s1478, 16, %s11, [#allocation4]
    $region49: #{tpu_custom_call.1} parent=1 // pred_fallthru
      _
    // Predicated region
    $region50: #{tpu_custom_call.1} parent=1 // pred_check
      _
    $region51: #{tpu_custom_call.1} parent=1 // pred_check_branch
      %1482 = sbr.rel (0) target = $region53
    $region52: #{tpu_custom_call.1} parent=1 // pred_region
      %1483 = dma.done [#allocation4], 16
    $region53: #{tpu_custom_call.1} parent=1 // pred_fallthru
      _
    %1484 = vsyncpa [#allocation4], 1

</llo_original>
